<compile_context>
chip_gen: v7x
topology: tpu7x:2x2x1
jax: 0.10.0
libtpu: 0.0.40
codegen_flags: <defaults>
</compile_context>

<pallas_src>
import functools

import jax
import jax.numpy as jnp
from jax.experimental import pallas as pl
from jax.experimental.pallas import tpu as pltpu


def _lineconv_kernel(p_ref, emb_ref, s_ref, out_ref, acc_ref):
    """One grid step = (E block j, V reduction block k).

    p_ref  : VMEM (B, tile_v)      pooling matrix block (1/len folded in)
    emb_ref: VMEM (tile_v, tile_e) padded embedding-table block
    s_ref  : VMEM (B, B)           S = I + DA + ... + DA^layers (precomputed)
    out_ref: VMEM (B, tile_e)      output block
    acc_ref: VMEM (B, tile_e) f32  x0 accumulator across the V reduction
    """
    k = pl.program_id(1)

    @pl.when(k == 0)
    def _():
        acc_ref[...] = jnp.zeros_like(acc_ref)

    # x0 partial: mean-pooled session embeddings via the MXU.
    acc_ref[...] += jnp.dot(p_ref[...], emb_ref[...],
                            preferred_element_type=jnp.float32)

    @pl.when(k == pl.num_programs(1) - 1)
    def _():
        # out = (I + DA + ... + DA^layers) @ x0, one small matmul per E block.
        out_ref[...] = jnp.dot(s_ref[...], acc_ref[...],
                               preferred_element_type=jnp.float32
                               ).astype(out_ref.dtype)


def line_conv(item_embedding, D, A, session_item, session_len,
              session_item_cat, *, layers, tile_e=None, tile_v=None):
    n_items, emb_size = item_embedding.shape
    B, L = session_item.shape
    layers = int(layers)

    # ---- lane-dense tile sizes (256 suits v6e/v7x MXU; clamp to padded dims).
    e_round = ((emb_size + 127) // 128) * 128
    if tile_e is None:
        tile_e = min(256, e_round)
    e_pad = ((emb_size + tile_e - 1) // tile_e) * tile_e

    v1 = n_items + 1                               # +1 for the zero padding row
    v_round = ((v1 + 127) // 128) * 128
    if tile_v is None:
        tile_v = min(512, v_round)
    v_pad = ((v1 + tile_v - 1) // tile_v) * tile_v

    # ---- padded embedding table: zero row 0, zero-pad V and E.
    emb = jnp.pad(item_embedding.astype(jnp.float32),
                  ((1, v_pad - v1), (0, e_pad - emb_size)))      # (v_pad, e_pad)

    # ---- pooling matrix P: P[b, idx[b, l]] += 1/len[b]  (gather+mean fused).
    idx = (session_item + session_item_cat).astype(jnp.int32)    # (B, L)
    inv_len = 1.0 / session_len.reshape(B).astype(jnp.float32)   # exact, in XLA
    vals = jnp.broadcast_to(inv_len[:, None], (B, L))
    P = jnp.zeros((B, v_pad), jnp.float32)
    P = P.at[jnp.arange(B)[:, None], idx].add(vals)              # (B, v_pad)

    # ---- layer collapse hoisted to XLA: S = I + DA + DA^2 + ... + DA^layers.
    da = jnp.matmul(D, A).astype(jnp.float32)
    S = jnp.eye(B, dtype=jnp.float32)
    power = jnp.eye(B, dtype=jnp.float32)
    for _ in range(layers):
        power = jnp.matmul(power, da)
        S = S + power

    n_eblk = e_pad // tile_e
    n_vblk = v_pad // tile_v

    flops = 2 * B * v_pad * e_pad + 2 * B * B * e_pad
    bytes_accessed = (B * v_pad * 4 * n_eblk      # P re-read per E block
                      + v_pad * e_pad * 4         # embedding table (read once)
                      + B * B * 4                 # S
                      + B * e_pad * 4)            # output

    out = pl.pallas_call(
        _lineconv_kernel,
        out_shape=jax.ShapeDtypeStruct((B, e_pad), jnp.float32),
        grid_spec=pltpu.PrefetchScalarGridSpec(
            num_scalar_prefetch=0,
            grid=(n_eblk, n_vblk),                 # (E parallel, V reduction)
            in_specs=[
                pl.BlockSpec((B, tile_v), lambda j, k: (0, k)),       # P
                pl.BlockSpec((tile_v, tile_e), lambda j, k: (k, j)),  # emb
                pl.BlockSpec((B, B), lambda j, k: (0, 0)),            # S
            ],
            out_specs=pl.BlockSpec((B, tile_e), lambda j, k: (0, j)),
            scratch_shapes=[pltpu.VMEM((B, tile_e), jnp.float32)],    # x0 acc
        ),
        compiler_params=pltpu.CompilerParams(
            dimension_semantics=("parallel", "arbitrary")),
        cost_estimate=pl.CostEstimate(
            flops=int(flops), transcendentals=0,
            bytes_accessed=int(bytes_accessed)),
    )(P, emb, S)

    return out[:, :emb_size]


def _reference(item_embedding, D, A, session_item, session_len,
               session_item_cat, layers):
    emb = jnp.concatenate(
        [jnp.zeros((1, item_embedding.shape[1]), item_embedding.dtype),
         item_embedding], axis=0)
    seq_h = jnp.take(emb, session_item + session_item_cat, axis=0)
    x = jnp.sum(seq_h, axis=1) / session_len
    da = jnp.matmul(D, A)
    acc = x
    for _ in range(layers):
        x = jnp.matmul(da, x)
        acc = acc + x
    return acc


if __name__ == "__main__":
    key = jax.random.PRNGKey(0)
    layers = 2
    batch = 8
    seq_len = 8
    emb_size = 32
    n_items = 20

    k1, k2, k3, k4, k5, k6 = jax.random.split(key, 6)
    item_embedding = jax.random.normal(k1, (n_items, emb_size), jnp.float32)
    D = 0.1 * jax.random.normal(k2, (batch, batch), jnp.float32)
    A = 0.1 * jax.random.normal(k3, (batch, batch), jnp.float32)
    # indices: sum of the two index tensors must stay within [0, n_items]
    session_item = jax.random.randint(k4, (batch, seq_len), 0, n_items // 2)
    session_item_cat = jax.random.randint(k5, (batch, seq_len), 0, n_items // 2)
    session_len = jax.random.randint(
        k6, (batch, 1), 1, seq_len + 1).astype(jnp.float32)

    out = line_conv(item_embedding, D, A, session_item, session_len,
                    session_item_cat, layers=layers)
    out = jax.block_until_ready(out)

    ref = _reference(item_embedding, D, A, session_item, session_len,
                     session_item_cat, layers)
    assert out.shape == (batch, emb_size)
    assert jnp.allclose(out, ref, atol=1e-4, rtol=1e-4)
    print("KERNEL_OK")
</pallas_src>

<mosaic_0001>
module attributes {stable_mosaic.version = 11 : i64} {
  func.func @_lineconv_kernel(%arg0: i32, %arg1: i32, %arg2: memref<8x128xf32, #tpu.memory_space<vmem>>, %arg3: memref<128x128xf32, #tpu.memory_space<vmem>>, %arg4: memref<8x8xf32, #tpu.memory_space<vmem>>, %arg5: memref<8x128xf32, #tpu.memory_space<vmem>>, %arg6: memref<8x128xf32, #tpu.memory_space<vmem>>) attributes {dimension_semantics = [#tpu.dimension_semantics<parallel>, #tpu.dimension_semantics<arbitrary>], iteration_bounds = array<i64: 1, 1>, scalar_prefetch = 0 : i64, scratch_operands = 1 : i64, tpu.core_type = #tpu.core_type<tc>, window_params = [{transform_indices = @transform_0, window_bounds = array<i64: 8, 128>}, {transform_indices = @transform_1, window_bounds = array<i64: 128, 128>}, {pipeline_mode = #tpu.pipeline_mode<synchronous>, transform_indices = @transform_2, window_bounds = array<i64: 8, 8>}, {transform_indices = @transform_3, window_bounds = array<i64: 8, 128>}]} {
    %c0_i32 = arith.constant 0 : i32
    %0 = arith.cmpi eq, %arg1, %c0_i32 : i32
    %1 = arith.extui %0 : i1 to i32
    %c0_i32_0 = arith.constant 0 : i32
    %2 = arith.cmpi ne, %1, %c0_i32_0 : i32
    scf.if %2 {
      %cst_10 = arith.constant 0.000000e+00 : f32
      %12 = vector.broadcast %cst_10 : f32 to vector<8x128xf32>
      %c0_11 = arith.constant 0 : index
      %c0_12 = arith.constant 0 : index
      %13 = vector.load %arg6[%c0_11, %c0_12] : memref<8x128xf32, #tpu.memory_space<vmem>>, vector<8x128xf32>
      tpu.vector_store %arg6[%c0_11, %c0_12], %12 {strides = array<i32>} : memref<8x128xf32, #tpu.memory_space<vmem>>, vector<8x128xf32>,
    } else {
    }
    %c0 = arith.constant 0 : index
    %c0_1 = arith.constant 0 : index
    %3 = vector.load %arg6[%c0, %c0_1] : memref<8x128xf32, #tpu.memory_space<vmem>>, vector<8x128xf32>
    %c0_2 = arith.constant 0 : index
    %c0_3 = arith.constant 0 : index
    %4 = vector.load %arg2[%c0_2, %c0_3] : memref<8x128xf32, #tpu.memory_space<vmem>>, vector<8x128xf32>
    %c0_4 = arith.constant 0 : index
    %c0_5 = arith.constant 0 : index
    %5 = vector.load %arg3[%c0_4, %c0_5] : memref<128x128xf32, #tpu.memory_space<vmem>>, vector<128x128xf32>
    %cst = arith.constant dense<0.000000e+00> : vector<8x128xf32>
    %6 = tpu.matmul %4, %5, %cst {dimension_numbers = #tpu.dot_dimension_numbers<[1], [0], [0], [1], [0, 0, 1, 1], [], []>} : vector<8x128xf32>, vector<128x128xf32>, vector<8x128xf32> -> vector<8x128xf32>
    %7 = arith.addf %3, %6 : vector<8x128xf32>
    %c0_6 = arith.constant 0 : index
    %c0_7 = arith.constant 0 : index
    %8 = vector.load %arg6[%c0_6, %c0_7] : memref<8x128xf32, #tpu.memory_space<vmem>>, vector<8x128xf32>
    tpu.vector_store %arg6[%c0_6, %c0_7], %7 {strides = array<i32>} : memref<8x128xf32, #tpu.memory_space<vmem>>, vector<8x128xf32>,
    %c0_i32_8 = arith.constant 0 : i32
    %9 = arith.cmpi eq, %arg1, %c0_i32_8 : i32
    %10 = arith.extui %9 : i1 to i32
    %c0_i32_9 = arith.constant 0 : i32
    %11 = arith.cmpi ne, %10, %c0_i32_9 : i32
    scf.if %11 {
      %c0_10 = arith.constant 0 : index
      %c0_11 = arith.constant 0 : index
      %12 = vector.load %arg4[%c0_10, %c0_11] : memref<8x8xf32, #tpu.memory_space<vmem>>, vector<8x8xf32>
      %c0_12 = arith.constant 0 : index
      %c0_13 = arith.constant 0 : index
      %13 = vector.load %arg6[%c0_12, %c0_13] : memref<8x128xf32, #tpu.memory_space<vmem>>, vector<8x128xf32>
      %cst_14 = arith.constant dense<0.000000e+00> : vector<8x128xf32>
      %14 = tpu.matmul %12, %13, %cst_14 {dimension_numbers = #tpu.dot_dimension_numbers<[1], [0], [0], [1], [0, 0, 1, 1], [], []>} : vector<8x8xf32>, vector<8x128xf32>, vector<8x128xf32> -> vector<8x128xf32>
      %c0_15 = arith.constant 0 : index
      %c0_16 = arith.constant 0 : index
      %15 = vector.load %arg5[%c0_15, %c0_16] : memref<8x128xf32, #tpu.memory_space<vmem>>, vector<8x128xf32>
      tpu.vector_store %arg5[%c0_15, %c0_16], %14 {strides = array<i32>} : memref<8x128xf32, #tpu.memory_space<vmem>>, vector<8x128xf32>,
    } else {
    }
    return
  }
  func.func @transform_0(%arg0: i32, %arg1: i32) -> (i32, i32) {
    %c0_i32 = arith.constant 0 : i32
    %c0_i32_0 = arith.constant 0 : i32
    return %c0_i32, %arg1 : i32, i32
  }
  func.func @transform_1(%arg0: i32, %arg1: i32) -> (i32, i32) {
    %c0_i32 = arith.constant 0 : i32
    return %arg1, %arg0 : i32, i32
  }
  func.func @transform_2(%arg0: i32, %arg1: i32) -> (i32, i32) {
    %c0_i32 = arith.constant 0 : i32
    %c0_i32_0 = arith.constant 0 : i32
    %c0_i32_1 = arith.constant 0 : i32
    return %c0_i32, %c0_i32_0 : i32, i32
  }
  func.func @transform_3(%arg0: i32, %arg1: i32) -> (i32, i32) {
    %c0_i32 = arith.constant 0 : i32
    %c0_i32_0 = arith.constant 0 : i32
    return %c0_i32, %arg0 : i32, i32
  }
}

</mosaic_0001>

<llo_original>
// kernel: tpu_custom_call.1
$region0: #{tpu_custom_call.1}
  #allocation0 [shape = 'u32[]', space=smem, size = 0x4, offset = 0x4, fixed_abs, tag = 'smem constant byte address 0x4 - core index']
  #allocation1 [shape = 'u32[144,128]{1,0:T(1,128)}', space=vmem, size = 0x12000, scoped, tag = 'internal scratch']
  #allocation2 [shape = 'f32[8,128]{1,0:T(8,128)}', space=vmem, size = 0x1000, scoped, tag = 'scratch operand']
  %s0 = inlined_call_operand.hbm [shape: f32[8,128], index: 0, kind: input, shape index: {}]
  %s1 = inlined_call_operand.hbm [shape: f32[128,128], index: 1, kind: input, shape index: {}]
  %s2 = inlined_call_operand.hbm [shape: f32[8,8], index: 2, kind: input, shape index: {}]
  %s3 = inlined_call_operand.hbm [shape: f32[8,128], index: 3, kind: output, shape index: {}]
  %s4 = sld [smem:[#allocation0]]
  $region42: #{tpu_custom_call.1} parent=0
    _
  %s6 = ssub.s32 1, %s4
  %s7 = scalar_select 0, %s6, %s4
  $region1: #{tpu_custom_call.1} parent=0
    #allocation3 [shape = 'u8[4096]{0}', space=vmem, size = 0x1000, scoped, tag = 'input window, operand 0, single buffered']
    #allocation4 [shape = 's32[1]{0}', space=sflag, size = 0x4, scoped, tag = 'scoped memory for tpu_custom_call.1']
    #allocation5 [shape = 's32[1]{0}', space=sflag, size = 0x4, scoped, tag = 'scoped memory for tpu_custom_call.1']
    #allocation6 [shape = 'u8[65536]{0}', space=vmem, size = 0x10000, scoped, tag = 'input window, operand 1, single buffered']
    #allocation7 [shape = 's32[1]{0}', space=sflag, size = 0x4, scoped, tag = 'scoped memory for tpu_custom_call.1']
    #allocation8 [shape = 'u8[4096]{0}', space=vmem, size = 0x1000, scoped, tag = 'input window, operand 2, single buffered']
    #allocation9 [shape = 'u8[4096]{0}', space=vmem, size = 0x1000, scoped, tag = 'output window, operand 0, single buffered']
    %8 = vsyncpa [#allocation4], 0
    %9 = vsyncpa [#allocation7], 0
    %10 = vsyncpa [#allocation5], 0
    // Predicated region
    $region2: #{tpu_custom_call.1} parent=1 // pred_check
      _
    $region3: #{tpu_custom_call.1} parent=1 // pred_check_branch
      %12 = sbr.rel (0) target = $region5
    $region4: #{tpu_custom_call.1} parent=1 // pred_region
      %s14 = ssub.s32 128, 128
      %15 = vsyncadd [#allocation4], %s14
      %s17 = sshll.u32 [#allocation3], 4
      %s18 = int_to_ptr.vmem [resolvable:$true] %s17
      %20 = dma.hbm_to_vmem [thread:$0]  %s0, 128, %s18, [#allocation4]
    $region5: #{tpu_custom_call.1} parent=1 // pred_fallthru
      _
    // Predicated region
    $region6: #{tpu_custom_call.1} parent=1 // pred_check
      _
    $region7: #{tpu_custom_call.1} parent=1 // pred_check_branch
      %22 = sbr.rel (0) target = $region9
    $region8: #{tpu_custom_call.1} parent=1 // pred_region
      %s24 = ssub.s32 2048, 2048
      %25 = vsyncadd [#allocation7], %s24
      %s26 = sshll.u32 [#allocation6], 4
      %s27 = int_to_ptr.vmem [resolvable:$true] %s26
      %32 = dma.hbm_to_vmem [thread:$0]  %s1, 2048, %s27, [#allocation7], 128, 128, 8
    $region9: #{tpu_custom_call.1} parent=1 // pred_fallthru
      _
    // Predicated region
    $region10: #{tpu_custom_call.1} parent=1 // pred_check
      _
    $region11: #{tpu_custom_call.1} parent=1 // pred_check_branch
      %34 = sbr.rel (0) target = $region13
    $region12: #{tpu_custom_call.1} parent=1 // pred_region
      %s36 = ssub.s32 128, 128
      %37 = vsyncadd [#allocation7], %s36
      %s39 = sshll.u32 [#allocation8], 4
      %s40 = int_to_ptr.vmem [resolvable:$true] %s39
      %42 = dma.hbm_to_vmem [thread:$0]  %s2, 128, %s40, [#allocation7]
    $region13: #{tpu_custom_call.1} parent=1 // pred_fallthru
      _
    // Predicated region
    $region14: #{tpu_custom_call.1} parent=1 // pred_check
      _
    $region15: #{tpu_custom_call.1} parent=1 // pred_check_branch
      %44 = sbr.rel (0) target = $region17
    $region16: #{tpu_custom_call.1} parent=1 // pred_region
      %45 = dma.done [#allocation4], 128
    $region17: #{tpu_custom_call.1} parent=1 // pred_fallthru
      _
    // Predicated region
    $region18: #{tpu_custom_call.1} parent=1 // pred_check
      _
    $region19: #{tpu_custom_call.1} parent=1 // pred_check_branch
      %47 = sbr.rel (0) target = $region21
    $region20: #{tpu_custom_call.1} parent=1 // pred_region
      %48 = dma.done [#allocation7], 2048
    $region21: #{tpu_custom_call.1} parent=1 // pred_fallthru
      _
    // Predicated region
    $region22: #{tpu_custom_call.1} parent=1 // pred_check
      _
    $region23: #{tpu_custom_call.1} parent=1 // pred_check_branch
      %50 = sbr.rel (0) target = $region25
    $region24: #{tpu_custom_call.1} parent=1 // pred_region
      %51 = dma.done [#allocation7], 128
    $region25: #{tpu_custom_call.1} parent=1 // pred_fallthru
      _
    %p52 = scmp.eq.s32.totalorder 0, 0
    // Predicated region
    $region26: #{tpu_custom_call.1} parent=1 // pred_check
      %p53 = pneg %p52
    $region27: #{tpu_custom_call.1} parent=1 // pred_check_branch
      %55 = sbr.rel (%p53) target = $region29
    $region28: #{tpu_custom_call.1} parent=1 // pred_region
      %56 = vst [vmem:[#allocation2] sm:$0xff] 0.0
    $region29: #{tpu_custom_call.1} parent=1 // pred_fallthru
      _
    %v57 = vld [vmem:[#allocation2] sm:$0xff]
    %v58 = vld [vmem:[#allocation3] sm:$0xff]
    %v59 = vld [vmem:[#allocation6] sm:$0xff]
    %v60 = vld [vmem:[#allocation6 + $0x8] sm:$0xff]
    %v61 = vld [vmem:[#allocation6 + $0x10] sm:$0xff]
    %v62 = vld [vmem:[#allocation6 + $0x18] sm:$0xff]
    %v63 = vld [vmem:[#allocation6 + $0x20] sm:$0xff]
    %v64 = vld [vmem:[#allocation6 + $0x28] sm:$0xff]
    %v65 = vld [vmem:[#allocation6 + $0x30] sm:$0xff]
    %v66 = vld [vmem:[#allocation6 + $0x38] sm:$0xff]
    %v67 = vld [vmem:[#allocation6 + $0x40] sm:$0xff]
    %v68 = vld [vmem:[#allocation6 + $0x48] sm:$0xff]
    %v69 = vld [vmem:[#allocation6 + $0x50] sm:$0xff]
    %v70 = vld [vmem:[#allocation6 + $0x58] sm:$0xff]
    %v71 = vld [vmem:[#allocation6 + $0x60] sm:$0xff]
    %v72 = vld [vmem:[#allocation6 + $0x68] sm:$0xff]
    %v73 = vld [vmem:[#allocation6 + $0x70] sm:$0xff]
    %v74 = vld [vmem:[#allocation6 + $0x78] sm:$0xff]
    %75 = vmatprep.subr.mxu0 0.0
    %76 = vmatpush1.msra.mxu0 %v59
    %77 = vmatprep.subr.mxu0 0.0
    %78 = vmatpush1.msra.mxu0 %v60
    %79 = vmatprep.subr.mxu0 0.0
    %80 = vmatpush1.msra.mxu0 %v61
    %81 = vmatprep.subr.mxu0 0.0
    %82 = vmatpush1.msra.mxu0 %v62
    %83 = vmatprep.subr.mxu0 0.0
    %84 = vmatpush1.msra.mxu0 %v63
    %85 = vmatprep.subr.mxu0 0.0
    %86 = vmatpush1.msra.mxu0 %v64
    %87 = vmatprep.subr.mxu0 0.0
    %88 = vmatpush1.msra.mxu0 %v65
    %89 = vmatprep.subr.mxu0 0.0
    %90 = vmatpush1.msra.mxu0 %v66
    %91 = vmatprep.subr.mxu0 0.0
    %92 = vmatpush1.msra.mxu0 %v67
    %93 = vmatprep.subr.mxu0 0.0
    %94 = vmatpush1.msra.mxu0 %v68
    %95 = vmatprep.subr.mxu0 0.0
    %96 = vmatpush1.msra.mxu0 %v69
    %97 = vmatprep.subr.mxu0 0.0
    %98 = vmatpush1.msra.mxu0 %v70
    %99 = vmatprep.subr.mxu0 0.0
    %100 = vmatpush1.msra.mxu0 %v71
    %101 = vmatprep.subr.mxu0 0.0
    %102 = vmatpush1.msra.mxu0 %v72
    %103 = vmatprep.subr.mxu0 0.0
    %104 = vmatpush1.msra.mxu0 %v73
    %105 = vmatprep.subr.mxu0 0.0
    %106 = vmatpush1.msra.mxu0 %v74
    %107 = vmatprep.subr.mxu0 0.0
    %108 = vmatpush1.msra.mxu0 0.0
    %109 = vmatprep.subr.mxu0 0.0
    %110 = vmatpush1.msra.mxu0 0.0
    %111 = vmatprep.subr.mxu0 0.0
    %112 = vmatpush1.msra.mxu0 0.0
    %113 = vmatprep.subr.mxu0 0.0
    %114 = vmatpush1.msra.mxu0 0.0
    %115 = vmatprep.subr.mxu0 0.0
    %116 = vmatpush1.msra.mxu0 0.0
    %117 = vmatprep.subr.mxu0 0.0
    %118 = vmatpush1.msra.mxu0 0.0
    %119 = vmatprep.subr.mxu0 0.0
    %120 = vmatpush1.msra.mxu0 0.0
    %121 = vmatprep.subr.mxu0 0.0
    %122 = vmatpush1.msra.mxu0 0.0
    %123 = vmatprep.subr.mxu0 0.0
    %124 = vmatpush1.msra.mxu0 0.0
    %125 = vmatprep.subr.mxu0 0.0
    %126 = vmatpush1.msra.mxu0 0.0
    %127 = vmatprep.subr.mxu0 0.0
    %128 = vmatpush1.msra.mxu0 0.0
    %129 = vmatprep.subr.mxu0 0.0
    %130 = vmatpush1.msra.mxu0 0.0
    %131 = vmatprep.subr.mxu0 0.0
    %132 = vmatpush1.msra.mxu0 0.0
    %133 = vmatprep.subr.mxu0 0.0
    %134 = vmatpush1.msra.mxu0 0.0
    %135 = vmatprep.subr.mxu0 0.0
    %136 = vmatpush1.msra.mxu0 0.0
    %137 = vmatprep.subr.mxu0 0.0
    %138 = vmatpush1.msra.mxu0 0.0
    %139 = vmatprep.mubr.f32.mxu0 0.0
    %140 = vmatmul.mubr.f32.gmra.mrb[0].mxu0 %v58
    %v141 = vpop.f32.mrb[0].mxu0
    %v142 = vadd.f32 0.0, %v141
    %v143 = vpop.f32.mrb[0].mxu0
    %144 = vdwg.mxu0
    %v145 = vadd.f32 %v57, %v142
    %146 = vst [vmem:[#allocation2] sm:$0xff] %v145
    // Predicated region
    $region30: #{tpu_custom_call.1} parent=1 // pred_check
      %p147 = pneg %p52
    $region31: #{tpu_custom_call.1} parent=1 // pred_check_branch
      %149 = sbr.rel (%p147) target = $region33
    $region32: #{tpu_custom_call.1} parent=1 // pred_region
      %v150 = vld [vmem:[#allocation8] sm:$0xff]
      %v151 = vld [vmem:[#allocation2] sm:$0xff]
      %vm152 = vcmask 64512
      %v154 = vsel %vm152, %v150, 0
      %156 = vmatprep.subr.mxu0 0.0
      %157 = vmatpush1.msra.mxu0 %v151
      %158 = vmatprep.subr.mxu0 0.0
      %159 = vmatpush1.msra.mxu0 0.0
      %160 = vmatprep.subr.mxu0 0.0
      %161 = vmatpush1.msra.mxu0 0.0
      %162 = vmatprep.subr.mxu0 0.0
      %163 = vmatpush1.msra.mxu0 0.0
      %164 = vmatprep.subr.mxu0 0.0
      %165 = vmatpush1.msra.mxu0 0.0
      %166 = vmatprep.subr.mxu0 0.0
      %167 = vmatpush1.msra.mxu0 0.0
      %168 = vmatprep.subr.mxu0 0.0
      %169 = vmatpush1.msra.mxu0 0.0
      %170 = vmatprep.subr.mxu0 0.0
      %171 = vmatpush1.msra.mxu0 0.0
      %172 = vmatprep.subr.mxu0 0.0
      %173 = vmatpush1.msra.mxu0 0.0
      %174 = vmatprep.subr.mxu0 0.0
      %175 = vmatpush1.msra.mxu0 0.0
      %176 = vmatprep.subr.mxu0 0.0
      %177 = vmatpush1.msra.mxu0 0.0
      %178 = vmatprep.subr.mxu0 0.0
      %179 = vmatpush1.msra.mxu0 0.0
      %180 = vmatprep.subr.mxu0 0.0
      %181 = vmatpush1.msra.mxu0 0.0
      %182 = vmatprep.subr.mxu0 0.0
      %183 = vmatpush1.msra.mxu0 0.0
      %184 = vmatprep.subr.mxu0 0.0
      %185 = vmatpush1.msra.mxu0 0.0
      %186 = vmatprep.subr.mxu0 0.0
      %187 = vmatpush1.msra.mxu0 0.0
      %188 = vmatprep.subr.mxu0 0.0
      %189 = vmatpush1.msra.mxu0 0.0
      %190 = vmatprep.subr.mxu0 0.0
      %191 = vmatpush1.msra.mxu0 0.0
      %192 = vmatprep.subr.mxu0 0.0
      %193 = vmatpush1.msra.mxu0 0.0
      %194 = vmatprep.subr.mxu0 0.0
      %195 = vmatpush1.msra.mxu0 0.0
      %196 = vmatprep.subr.mxu0 0.0
      %197 = vmatpush1.msra.mxu0 0.0
      %198 = vmatprep.subr.mxu0 0.0
      %199 = vmatpush1.msra.mxu0 0.0
      %200 = vmatprep.subr.mxu0 0.0
      %201 = vmatpush1.msra.mxu0 0.0
      %202 = vmatprep.subr.mxu0 0.0
      %203 = vmatpush1.msra.mxu0 0.0
      %204 = vmatprep.subr.mxu0 0.0
      %205 = vmatpush1.msra.mxu0 0.0
      %206 = vmatprep.subr.mxu0 0.0
      %207 = vmatpush1.msra.mxu0 0.0
      %208 = vmatprep.subr.mxu0 0.0
      %209 = vmatpush1.msra.mxu0 0.0
      %210 = vmatprep.subr.mxu0 0.0
      %211 = vmatpush1.msra.mxu0 0.0
      %212 = vmatprep.subr.mxu0 0.0
      %213 = vmatpush1.msra.mxu0 0.0
      %214 = vmatprep.subr.mxu0 0.0
      %215 = vmatpush1.msra.mxu0 0.0
      %216 = vmatprep.subr.mxu0 0.0
      %217 = vmatpush1.msra.mxu0 0.0
      %218 = vmatprep.subr.mxu0 0.0
      %219 = vmatpush1.msra.mxu0 0.0
      %220 = vmatprep.mubr.f32.mxu0 0.0
      %221 = vmatmul.mubr.f32.gmra.mrb[0].mxu0 %v154
      %v222 = vpop.f32.mrb[0].mxu0
      %v223 = vadd.f32 0.0, %v222
      %v224 = vpop.f32.mrb[0].mxu0
      %225 = vdwg.mxu0
      %226 = vst [vmem:[#allocation9] sm:$0xff] %v223
    $region33: #{tpu_custom_call.1} parent=1 // pred_fallthru
      _
    // Predicated region
    $region34: #{tpu_custom_call.1} parent=1 // pred_check
      _
    $region35: #{tpu_custom_call.1} parent=1 // pred_check_branch
      %228 = sbr.rel (0) target = $region37
    $region36: #{tpu_custom_call.1} parent=1 // pred_region
      %s230 = ssub.s32 128, 128
      %231 = vsyncadd [#allocation5], %s230
      %s233 = sshll.u32 [#allocation9], 4
      %s234 = int_to_ptr.vmem [resolvable:$true] %s233
      %236 = dma.vmem_to_hbm [thread:$0]  %s234, 128, %s3, [#allocation5]
    $region37: #{tpu_custom_call.1} parent=1 // pred_fallthru
      _
    // Predicated region
    $region38: #{tpu_custom_call.1} parent=1 // pred_check
      _
    $region39: #{tpu_custom_call.1} parent=1 // pred_check_branch
      %238 = sbr.rel (0) target = $region41
    $region40: #{tpu_custom_call.1} parent=1 // pred_region
      %239 = dma.done [#allocation5], 128
    $region41: #{tpu_custom_call.1} parent=1 // pred_fallthru
      _
    %240 = vsyncpa [#allocation4], 1
    %241 = vsyncpa [#allocation7], 1
    %242 = vsyncpa [#allocation5], 1

</llo_original>
